<compile_context>
chip_gen: v6e
topology: v6e:2x2x1
jax: 0.10.0
libtpu: 0.0.40
codegen_flags: <defaults>
</compile_context>

<pallas_src>
import functools

import jax
import jax.numpy as jnp
from jax.experimental import pallas as pl
from jax.experimental.pallas import tpu as pltpu


def _round_up(n, m):
    return ((n + m - 1) // m) * m


def _choose_blocking(B, S_pad, max_rows=4096):
    """bb * S_pad flattened rows per grid step.  Prefer an even number of grid
    steps (>= 2) so v7x's two TensorCores stay balanced; on single-TC v5e/v6e the
    extra split is a ~0.35 us no-op and blocks are otherwise as large as max_rows
    allows (batch is zero-padded up to grid*bb in the wrapper)."""
    max_bb = max(1, max_rows // S_pad)
    bb = min(B, max_bb)
    grid = -(-B // bb)
    if B >= 2 and grid == 1:
        bb = -(-B // 2)
        grid = -(-B // bb)
    if grid > 1 and grid % 2 == 1:
        grid += 1  # one extra all-padding step: cheap, keeps the two TCs balanced
    return bb, grid, grid * bb


def self_attention_kernel(x_ref, w1_ref, b1_ref, w2_ref, b2_ref, o_ref,
                          *, bb, seq_pad, seq, r, mxu_dtype, approx_recip):
    D = x_ref.shape[-1]
    # Flatten (bb, S_pad, D) -> (bb*S_pad, D): one large-M matmul per grid step.
    # S_pad is a multiple of 8, so this reshape never crosses an (8,128) tile.
    x = x_ref[...].reshape(bb * seq_pad, D)
    if x.dtype != mxu_dtype:
        x = x.astype(mxu_dtype)

    # Linear(2*lstm_dim, da) + Tanh  (f32 accumulation, f32 elementwise math).
    h = jnp.tanh(
        jnp.dot(x, w1_ref[...], preferred_element_type=jnp.float32) + b1_ref[...]
    )  # (bb*S_pad, da_p)

    # Linear(da, r): computed at the lane-padded width r_p for full-lane vector math.
    logits = (
        jnp.dot(h.astype(mxu_dtype), w2_ref[...], preferred_element_type=jnp.float32)
        + b2_ref[...]
    ).reshape(bb, seq_pad, -1)  # (bb, S_pad, r_p)

    # Mask sequence padding before the softmax over the sequence axis.
    if seq_pad != seq:
        seq_ids = jax.lax.broadcasted_iota(jnp.int32, (1, seq_pad, 1), 1)
        logits = jnp.where(seq_ids < seq, logits, -1e30)

    # softmax over the sequence axis (dim=1 of the (B, S, r) tensor).
    m = jnp.max(logits, axis=1, keepdims=True)
    e = jnp.exp(logits - m)
    denom = jnp.sum(e, axis=1, keepdims=True)
    if approx_recip:
        out = e * pl.reciprocal(denom, approx=True)  # EUP slot, off the VPU path
    else:
        out = e / denom

    # Store only the real r columns: no padded-output HBM writeback.
    o_ref[...] = out[:, :, :r].astype(o_ref.dtype)


def self_attention(x, w1, b1, w2, b2, *, block_batch=None, max_rows=4096,
                   mxu_dtype=jnp.bfloat16, approx_recip=True):
    B, S, D = x.shape
    out_dtype = x.dtype
    b1 = jnp.reshape(b1, (1, -1))
    b2 = jnp.reshape(b2, (1, -1))
    da = w1.shape[1]
    r = w2.shape[1]

    # Lane-dense padding of the hidden/output COMPUTE widths.  Zero padding keeps
    # the math exact: padded w1 columns give tanh(0)=0 rows that meet zero w2 rows,
    # and padded logit columns never leave the kernel.
    da_p = _round_up(max(da, 128), 128)
    r_p = _round_up(max(r, 128), 128)

    w1p = (jnp.zeros((D, da_p), jnp.float32)
           .at[:, :da].set(w1.astype(jnp.float32)).astype(mxu_dtype))
    b1p = jnp.zeros((1, da_p), jnp.float32).at[:, :da].set(b1.astype(jnp.float32))
    w2p = (jnp.zeros((da_p, r_p), jnp.float32)
           .at[:da, :r].set(w2.astype(jnp.float32)).astype(mxu_dtype))
    b2p = jnp.zeros((1, r_p), jnp.float32).at[:, :r].set(b2.astype(jnp.float32))

    # Sublane-align the sequence (padded rows are masked to -inf before the softmax).
    S_pad = _round_up(S, 8)

    if block_batch is not None:
        bb = block_batch
        grid_n = -(-B // bb)
        B_pad = grid_n * bb
    else:
        bb, grid_n, B_pad = _choose_blocking(B, S_pad, max_rows=max_rows)

    # bf16 x in HBM when using the bf16 MXU path: halves the dominant HBM read.
    x_in = x.astype(mxu_dtype) if x.dtype != mxu_dtype else x
    if B_pad != B or S_pad != S:
        x_in = jnp.pad(x_in, ((0, B_pad - B), (0, S_pad - S), (0, 0)))

    kernel = functools.partial(
        self_attention_kernel, bb=bb, seq_pad=S_pad, seq=S, r=r,
        mxu_dtype=mxu_dtype, approx_recip=approx_recip)

    x_bytes = B_pad * S_pad * D * x_in.dtype.itemsize
    w_bytes = ((D * da_p + da_p * r_p) * jnp.dtype(mxu_dtype).itemsize
               + (da_p + r_p) * 4)
    out_bytes = B_pad * S_pad * r * jnp.dtype(out_dtype).itemsize
    cost = pl.CostEstimate(
        flops=2 * B_pad * S_pad * (D * da_p + da_p * r_p),
        transcendentals=B_pad * S_pad * (da_p + r_p),
        bytes_accessed=x_bytes + w_bytes + out_bytes,
    )

    # VMEM need: double-buffered x/out tiles + (double-buffered) weights + f32
    # intermediates (h plus a few live r_p-wide temps), generous headroom, capped
    # at 64 MiB so it is safe on v7x and far under v5e/v6e's 128 MiB.
    rows = bb * S_pad
    need = (2 * rows * D * x_in.dtype.itemsize
            + 2 * bb * S_pad * r * jnp.dtype(out_dtype).itemsize
            + 2 * w_bytes
            + rows * da_p * 4
            + 4 * rows * r_p * 4)
    vmem_limit = int(min(max(2 * need + (8 << 20), 32 << 20), 64 << 20))

    out = pl.pallas_call(
        kernel,
        out_shape=jax.ShapeDtypeStruct((B_pad, S_pad, r), out_dtype),
        grid_spec=pltpu.PrefetchScalarGridSpec(
            num_scalar_prefetch=0,
            grid=(grid_n,),
            in_specs=[
                pl.BlockSpec((bb, S_pad, D), lambda i: (i, 0, 0)),
                # Grid-invariant operands: constant index_maps -> DMA'd once, never
                # re-fetched across grid steps.  (pipeline_mode=pl.Buffered(1) could
                # drop their second buffer; skipped since the padded weights total
                # well under 100 KiB here.)
                pl.BlockSpec((D, da_p), lambda i: (0, 0)),
                pl.BlockSpec((1, da_p), lambda i: (0, 0)),
                pl.BlockSpec((da_p, r_p), lambda i: (0, 0)),
                pl.BlockSpec((1, r_p), lambda i: (0, 0)),
            ],
            out_specs=pl.BlockSpec((bb, S_pad, r), lambda i: (i, 0, 0)),
        ),
        compiler_params=pltpu.CompilerParams(
            dimension_semantics=("parallel",),
            vmem_limit_bytes=vmem_limit,
        ),
        cost_estimate=cost,
    )(x_in, w1p, b1p, w2p, b2p)

    if B_pad != B or S_pad != S:
        out = out[:B, :S, :]
    return out


def self_attention_ref(x, w1, b1, w2, b2):
    h = jnp.tanh(x @ w1 + b1)              # (B, S, da)
    logits = h @ w2 + b2                   # (B, S, r)
    return jax.nn.softmax(logits, axis=1)  # softmax over seq dim


if __name__ == "__main__":
    # Module hyperparameters (small, consistent with the forward pass)
    lstm_dim = 16
    da = 32
    r = 4
    B, S = 2, 8
    D = lstm_dim * 2  # input feature size of the first Linear

    key = jax.random.PRNGKey(0)
    kx, kw1, kb1, kw2, kb2 = jax.random.split(key, 5)

    x = jax.random.normal(kx, (B, S, D), dtype=jnp.float32)
    w1 = jax.random.normal(kw1, (D, da), dtype=jnp.float32) * 0.1   # Linear(2*lstm_dim, da).weight.T
    b1 = jax.random.normal(kb1, (1, da), dtype=jnp.float32) * 0.1   # Linear(2*lstm_dim, da).bias
    w2 = jax.random.normal(kw2, (da, r), dtype=jnp.float32) * 0.1   # Linear(da, r).weight.T
    b2 = jax.random.normal(kb2, (1, r), dtype=jnp.float32) * 0.1    # Linear(da, r).bias

    ref = self_attention_ref(x, w1, b1, w2, b2)

    # Default fast path: bf16 MXU operands (f32 accumulation) + approx reciprocal.
    out = jax.block_until_ready(self_attention(x, w1, b1, w2, b2))
    assert out.shape == (B, S, r)
    assert jnp.allclose(out, ref, atol=5e-3, rtol=5e-2), "bf16 path mismatch vs reference"

    # Exact f32 MXU path (validation): tight tolerance.
    out_f32 = jax.block_until_ready(
        self_attention(x, w1, b1, w2, b2,
                       mxu_dtype=jnp.float32, approx_recip=False))
    assert out_f32.shape == (B, S, r)
    assert jnp.allclose(out_f32, ref, atol=1e-5, rtol=1e-5), "f32 path mismatch vs reference"

    print("KERNEL_OK")
</pallas_src>

<mosaic_0001>
module attributes {stable_mosaic.version = 11 : i64} {
  func.func @self_attention_kernel(%arg0: i32, %arg1: memref<1x8x32xbf16, #tpu.memory_space<vmem>>, %arg2: memref<32x128xbf16, #tpu.memory_space<vmem>>, %arg3: memref<1x128xf32, #tpu.memory_space<vmem>>, %arg4: memref<128x128xbf16, #tpu.memory_space<vmem>>, %arg5: memref<1x128xf32, #tpu.memory_space<vmem>>, %arg6: memref<1x8x4xf32, #tpu.memory_space<vmem>>) attributes {dimension_semantics = [#tpu.dimension_semantics<parallel>], iteration_bounds = array<i64: 2>, scalar_prefetch = 0 : i64, scratch_operands = 0 : i64, tpu.core_type = #tpu.core_type<tc>, window_params = [{transform_indices = @transform_0, window_bounds = array<i64: 1, 8, 32>}, {pipeline_mode = #tpu.pipeline_mode<synchronous>, transform_indices = @transform_1, window_bounds = array<i64: 32, 128>}, {pipeline_mode = #tpu.pipeline_mode<synchronous>, transform_indices = @transform_2, window_bounds = array<i64: 1, 128>}, {pipeline_mode = #tpu.pipeline_mode<synchronous>, transform_indices = @transform_3, window_bounds = array<i64: 128, 128>}, {pipeline_mode = #tpu.pipeline_mode<synchronous>, transform_indices = @transform_4, window_bounds = array<i64: 1, 128>}, {transform_indices = @transform_5, window_bounds = array<i64: 1, 8, 4>}]} {
    %c0 = arith.constant 0 : index
    %c0_0 = arith.constant 0 : index
    %c0_1 = arith.constant 0 : index
    %0 = vector.load %arg1[%c0, %c0_0, %c0_1] : memref<1x8x32xbf16, #tpu.memory_space<vmem>>, vector<1x8x32xbf16>
    %1 = vector.shape_cast %0 : vector<1x8x32xbf16> to vector<8x32xbf16>
    %c0_2 = arith.constant 0 : index
    %c0_3 = arith.constant 0 : index
    %2 = vector.load %arg2[%c0_2, %c0_3] : memref<32x128xbf16, #tpu.memory_space<vmem>>, vector<32x128xbf16>
    %cst = arith.constant dense<0.000000e+00> : vector<8x128xf32>
    %3 = tpu.matmul %1, %2, %cst {dimension_numbers = #tpu.dot_dimension_numbers<[1], [0], [0], [1], [0, 0, 1, 1], [], []>} : vector<8x32xbf16>, vector<32x128xbf16>, vector<8x128xf32> -> vector<8x128xf32>
    %c0_4 = arith.constant 0 : index
    %c0_5 = arith.constant 0 : index
    %4 = vector.load %arg3[%c0_4, %c0_5] : memref<1x128xf32, #tpu.memory_space<vmem>>, vector<1x128xf32>
    %5 = vector.broadcast %4 : vector<1x128xf32> to vector<8x128xf32>
    %6 = arith.addf %3, %5 : vector<8x128xf32>
    %7 = math.tanh %6 : vector<8x128xf32>
    %8 = arith.truncf %7 : vector<8x128xf32> to vector<8x128xbf16>
    %c0_6 = arith.constant 0 : index
    %c0_7 = arith.constant 0 : index
    %9 = vector.load %arg4[%c0_6, %c0_7] : memref<128x128xbf16, #tpu.memory_space<vmem>>, vector<128x128xbf16>
    %cst_8 = arith.constant dense<0.000000e+00> : vector<8x128xf32>
    %10 = tpu.matmul %8, %9, %cst_8 {dimension_numbers = #tpu.dot_dimension_numbers<[1], [0], [0], [1], [0, 0, 1, 1], [], []>} : vector<8x128xbf16>, vector<128x128xbf16>, vector<8x128xf32> -> vector<8x128xf32>
    %c0_9 = arith.constant 0 : index
    %c0_10 = arith.constant 0 : index
    %11 = vector.load %arg5[%c0_9, %c0_10] : memref<1x128xf32, #tpu.memory_space<vmem>>, vector<1x128xf32>
    %12 = vector.broadcast %11 : vector<1x128xf32> to vector<8x128xf32>
    %13 = arith.addf %10, %12 : vector<8x128xf32>
    %14 = vector.shape_cast %13 : vector<8x128xf32> to vector<1x8x128xf32>
    %cst_11 = arith.constant dense<0xFF800000> : vector<1x128xf32>
    %15 = vector.multi_reduction <maximumf>, %14, %cst_11 [1] : vector<1x8x128xf32> to vector<1x128xf32>
    %16 = vector.shape_cast %15 : vector<1x128xf32> to vector<1x1x128xf32>
    %17 = vector.broadcast %16 : vector<1x1x128xf32> to vector<1x8x128xf32>
    %18 = arith.subf %14, %17 : vector<1x8x128xf32>
    %19 = math.exp %18 : vector<1x8x128xf32>
    %cst_12 = arith.constant dense<0.000000e+00> : vector<1x128xf32>
    %20 = vector.multi_reduction <add>, %19, %cst_12 [1] : vector<1x8x128xf32> to vector<1x128xf32>
    %21 = vector.shape_cast %20 : vector<1x128xf32> to vector<1x1x128xf32>
    %22 = tpu.reciprocal %21 {approx = true} : vector<1x1x128xf32> -> vector<1x1x128xf32>
    %23 = vector.broadcast %22 : vector<1x1x128xf32> to vector<1x8x128xf32>
    %24 = arith.mulf %19, %23 : vector<1x8x128xf32>
    %25 = vector.extract_strided_slice %24 {offsets = [0, 0, 0], sizes = [1, 8, 4], strides = [1, 1, 1]} : vector<1x8x128xf32> to vector<1x8x4xf32>
    %c0_13 = arith.constant 0 : index
    %c0_14 = arith.constant 0 : index
    %c0_15 = arith.constant 0 : index
    %26 = vector.load %arg6[%c0_13, %c0_14, %c0_15] : memref<1x8x4xf32, #tpu.memory_space<vmem>>, vector<1x8x4xf32>
    tpu.vector_store %arg6[%c0_13, %c0_14, %c0_15], %25 {strides = array<i32>} : memref<1x8x4xf32, #tpu.memory_space<vmem>>, vector<1x8x4xf32>,
    return
  }
  func.func @transform_0(%arg0: i32) -> (i32, i32, i32) {
    %c0_i32 = arith.constant 0 : i32
    %c0_i32_0 = arith.constant 0 : i32
    %c0_i32_1 = arith.constant 0 : i32
    return %arg0, %c0_i32, %c0_i32_0 : i32, i32, i32
  }
  func.func @transform_1(%arg0: i32) -> (i32, i32) {
    %c0_i32 = arith.constant 0 : i32
    %c0_i32_0 = arith.constant 0 : i32
    %c0_i32_1 = arith.constant 0 : i32
    return %c0_i32, %c0_i32_0 : i32, i32
  }
  func.func @transform_2(%arg0: i32) -> (i32, i32) {
    %c0_i32 = arith.constant 0 : i32
    %c0_i32_0 = arith.constant 0 : i32
    %c0_i32_1 = arith.constant 0 : i32
    return %c0_i32, %c0_i32_0 : i32, i32
  }
  func.func @transform_3(%arg0: i32) -> (i32, i32) {
    %c0_i32 = arith.constant 0 : i32
    %c0_i32_0 = arith.constant 0 : i32
    %c0_i32_1 = arith.constant 0 : i32
    return %c0_i32, %c0_i32_0 : i32, i32
  }
  func.func @transform_4(%arg0: i32) -> (i32, i32) {
    %c0_i32 = arith.constant 0 : i32
    %c0_i32_0 = arith.constant 0 : i32
    %c0_i32_1 = arith.constant 0 : i32
    return %c0_i32, %c0_i32_0 : i32, i32
  }
  func.func @transform_5(%arg0: i32) -> (i32, i32, i32) {
    %c0_i32 = arith.constant 0 : i32
    %c0_i32_0 = arith.constant 0 : i32
    %c0_i32_1 = arith.constant 0 : i32
    return %arg0, %c0_i32, %c0_i32_0 : i32, i32, i32
  }
}

</mosaic_0001>

<llo_original>
// kernel: tpu_custom_call.1
$region0: #{tpu_custom_call.1}
  #allocation0 [shape = 'u32[]', space=smem, size = 0x4, offset = 0x4, fixed_abs, tag = 'smem constant byte address 0x4 - core index']
  #allocation1 [shape = 'u32[144,128]{1,0:T(1,128)}', space=vmem, size = 0x12000, scoped, tag = 'internal scratch']
  %s0 = inlined_call_operand.hbm [shape: bf16[2,8,32], index: 0, kind: input, shape index: {}]
  %s1 = inlined_call_operand.hbm [shape: bf16[32,128], index: 1, kind: input, shape index: {}]
  %s2 = inlined_call_operand.vmem [shape: f32[1,128], index: 2, kind: input, shape index: {}]
  %s3 = inlined_call_operand.hbm [shape: bf16[128,128], index: 3, kind: input, shape index: {}]
  %s4 = inlined_call_operand.vmem [shape: f32[1,128], index: 4, kind: input, shape index: {}]
  %s5 = inlined_call_operand.vmem [shape: f32[2,8,4], index: 5, kind: output, shape index: {}]
  %s6 = sld [smem:[#allocation0]]
  $region65: #{tpu_custom_call.1} parent=0
    _
  %s8 = ssub.s32 1, %s6
  %s9 = scalar_select 0, %s8, %s6
  $region1: #{tpu_custom_call.1} parent=0
    #allocation2 [shape = 'u8[4096]{0}', space=vmem, size = 0x1000, scoped, tag = 'input window, operand 0']
    #allocation3 [shape = 's32[2]{0}', space=sflag, size = 0x8, scoped, tag = 'scoped memory for tpu_custom_call.1']
    #allocation4 [shape = 'u8[8192]{0}', space=vmem, size = 0x2000, scoped, tag = 'input window, operand 1, single buffered']
    #allocation5 [shape = 's32[1]{0}', space=sflag, size = 0x4, scoped, tag = 'scoped memory for tpu_custom_call.1']
    #allocation6 [shape = 'u8[32768]{0}', space=vmem, size = 0x8000, scoped, tag = 'input window, operand 3, single buffered']
    %10 = vsyncpa [#allocation3], 0
    %s11 = scalar_lea.sflag [#allocation3], 1
    %12 = vsyncpa %s11, 0
    %13 = vsyncpa [#allocation5], 0
    loop: start=0, step=1, limit=4
    $region2: #{tpu_custom_call.1} parent=1 // loop_pre_header
      _
    $region3: #{tpu_custom_call.1} parent=1 // loop_header
      %s15 = sphi 0, %s19
      %p16 = scmp.ge.s32.totalorder %s15, 4
      %s25 = sphi 0, %s27
      %s28 = sphi 0, %s25
      %s29 = sphi 0, %s28
      %s45 = sphi 0, %s29
      %s49 = sphi 0, %s49
      %s51 = sphi 0, %s49
      %s52 = sphi 0, %s51
      %s66 = sphi 0, %s52
      %s70 = sphi 0, %s70
      %s72 = sphi 0, %s70
      %s73 = sphi 0, %s72
      %s87 = sphi 0, %s73
      %s91 = sphi 0, %s91
      %s93 = sphi 0, %s91
      %s94 = sphi 0, %s93
      %s108 = sphi 0, %s94
      %s112 = sphi 0, %s112
      %s114 = sphi 0, %s112
      %s115 = sphi 0, %s114
      %s129 = sphi 0, %s115
      %s135 = sphi 0, %s137
      %s138 = sphi 0, %s135
      %s139 = sphi 0, %s138
      %s155 = sphi 0, %s139
    $region4: #{tpu_custom_call.1} parent=1 // loop_header_branch
      %18 = sbr.rel (%p16) target = $region8
    $region5: #{tpu_custom_call.1} parent=1 // loop_body
      %s20 = ssub.s32 %s15, 1
      %s21 = ssub.s32 %s15, 2
      %s22 = sadd.s32 %s15, 1
      %s23 = ssub.s32 %s15, %s22
      %p24 = scmp.eq.s32.totalorder %s23, 0
      %s26 = sadd.s32 %s25, 1
      %s27 = scalar_select %p24, %s25, %s26
      %p30 = pneg %p24
      %p31 = scmp.eq.s32.totalorder %s15, 1
      %p32 = por %p30, %p31
      %p33 = scmp.ne.s32.totalorder %s25, %s28
      %p34 = scmp.eq.s32.totalorder %s15, 0
      %p35 = por %p33, %p34
      %p36 = scmp.ne.s32.totalorder %s25, %s28
      %p37 = scmp.eq.s32.totalorder %s20, 1
      %p38 = por %p36, %p37
      %p39 = scmp.ne.s32.totalorder %s28, %s29
      %p40 = scmp.eq.s32.totalorder %s20, 0
      %p41 = por %p39, %p40
      %p42 = scmp.ne.s32.totalorder %s28, %s29
      %p43 = scmp.eq.s32.totalorder %s21, 1
      %p44 = por %p42, %p43
      %p46 = scmp.ne.s32.totalorder %s29, %s45
      %p47 = scmp.eq.s32.totalorder %s21, 0
      %p48 = por %p46, %p47
      %s50 = sadd.s32 %s49, 1
      %p53 = scmp.eq.s32.totalorder %s15, 1
      %p54 = scmp.ne.s32.totalorder %s49, %s51
      %p55 = scmp.eq.s32.totalorder %s15, 0
      %p56 = por %p54, %p55
      %p57 = scmp.ne.s32.totalorder %s49, %s51
      %p58 = scmp.eq.s32.totalorder %s20, 1
      %p59 = por %p57, %p58
      %p60 = scmp.ne.s32.totalorder %s51, %s52
      %p61 = scmp.eq.s32.totalorder %s20, 0
      %p62 = por %p60, %p61
      %p63 = scmp.ne.s32.totalorder %s51, %s52
      %p64 = scmp.eq.s32.totalorder %s21, 1
      %p65 = por %p63, %p64
      %p67 = scmp.ne.s32.totalorder %s52, %s66
      %p68 = scmp.eq.s32.totalorder %s21, 0
      %p69 = por %p67, %p68
      %s71 = sadd.s32 %s70, 1
      %p74 = scmp.eq.s32.totalorder %s15, 1
      %p75 = scmp.ne.s32.totalorder %s70, %s72
      %p76 = scmp.eq.s32.totalorder %s15, 0
      %p77 = por %p75, %p76
      %p78 = scmp.ne.s32.totalorder %s70, %s72
      %p79 = scmp.eq.s32.totalorder %s20, 1
      %p80 = por %p78, %p79
      %p81 = scmp.ne.s32.totalorder %s72, %s73
      %p82 = scmp.eq.s32.totalorder %s20, 0
      %p83 = por %p81, %p82
      %p84 = scmp.ne.s32.totalorder %s72, %s73
      %p85 = scmp.eq.s32.totalorder %s21, 1
      %p86 = por %p84, %p85
      %p88 = scmp.ne.s32.totalorder %s73, %s87
      %p89 = scmp.eq.s32.totalorder %s21, 0
      %p90 = por %p88, %p89
      %s92 = sadd.s32 %s91, 1
      %p95 = scmp.eq.s32.totalorder %s15, 1
      %p96 = scmp.ne.s32.totalorder %s91, %s93
      %p97 = scmp.eq.s32.totalorder %s15, 0
      %p98 = por %p96, %p97
      %p99 = scmp.ne.s32.totalorder %s91, %s93
      %p100 = scmp.eq.s32.totalorder %s20, 1
      %p101 = por %p99, %p100
      %p102 = scmp.ne.s32.totalorder %s93, %s94
      %p103 = scmp.eq.s32.totalorder %s20, 0
      %p104 = por %p102, %p103
      %p105 = scmp.ne.s32.totalorder %s93, %s94
      %p106 = scmp.eq.s32.totalorder %s21, 1
      %p107 = por %p105, %p106
      %p109 = scmp.ne.s32.totalorder %s94, %s108
      %p110 = scmp.eq.s32.totalorder %s21, 0
      %p111 = por %p109, %p110
      %s113 = sadd.s32 %s112, 1
      %p116 = scmp.eq.s32.totalorder %s15, 1
      %p117 = scmp.ne.s32.totalorder %s112, %s114
      %p118 = scmp.eq.s32.totalorder %s15, 0
      %p119 = por %p117, %p118
      %p120 = scmp.ne.s32.totalorder %s112, %s114
      %p121 = scmp.eq.s32.totalorder %s20, 1
      %p122 = por %p120, %p121
      %p123 = scmp.ne.s32.totalorder %s114, %s115
      %p124 = scmp.eq.s32.totalorder %s20, 0
      %p125 = por %p123, %p124
      %p126 = scmp.ne.s32.totalorder %s114, %s115
      %p127 = scmp.eq.s32.totalorder %s21, 1
      %p128 = por %p126, %p127
      %p130 = scmp.ne.s32.totalorder %s115, %s129
      %p131 = scmp.eq.s32.totalorder %s21, 0
      %p132 = por %p130, %p131
      %s133 = ssub.s32 %s15, %s22
      %p134 = scmp.eq.s32.totalorder %s133, 0
      %s136 = sadd.s32 %s135, 1
      %s137 = scalar_select %p134, %s135, %s136
      %p140 = pneg %p134
      %p141 = scmp.eq.s32.totalorder %s15, 1
      %p142 = por %p140, %p141
      %p143 = scmp.ne.s32.totalorder %s135, %s138
      %p144 = scmp.eq.s32.totalorder %s15, 0
      %p145 = por %p143, %p144
      %p146 = scmp.ne.s32.totalorder %s135, %s138
      %p147 = scmp.eq.s32.totalorder %s20, 1
      %p148 = por %p146, %p147
      %p149 = scmp.ne.s32.totalorder %s138, %s139
      %p150 = scmp.eq.s32.totalorder %s20, 0
      %p151 = por %p149, %p150
      %p152 = scmp.ne.s32.totalorder %s138, %s139
      %p153 = scmp.eq.s32.totalorder %s21, 1
      %p154 = por %p152, %p153
      %p156 = scmp.ne.s32.totalorder %s139, %s155
      %p157 = scmp.eq.s32.totalorder %s21, 0
      %p158 = por %p156, %p157
      %p159 = scmp.le.s32.totalorder 1, %s15
      %p160 = scmp.lt.s32.totalorder %s15, 3
      %p161 = pnand %p159, %p160
      %p162 = pneg %p161
      // Predicated region
      $region9: #{tpu_custom_call.1} parent=5 // pred_check
        _
      $region10: #{tpu_custom_call.1} parent=5 // pred_check_branch
        %164 = sbr.rel (%p161) target = $region12
      $region11: #{tpu_custom_call.1} parent=5 // pred_region
        %s165 = ssub.s32 %s15, 1
        // Predicated region
        $region13: #{tpu_custom_call.1} parent=11 // pred_check
          %p166 = pneg %p62
        $region14: #{tpu_custom_call.1} parent=11 // pred_check_branch
          %168 = sbr.rel (%p166) target = $region16
        $region15: #{tpu_custom_call.1} parent=11 // pred_region
          %s170 = ssub.s32 256, 256
          %171 = vsyncadd [#allocation5], %s170
          %s172 = sshll.u32 [#allocation4], 4
          %s173 = int_to_ptr.vmem [resolvable:$true] %s172
          %178 = dma.hbm_to_vmem [thread:$0]  %s1, 256, %s173, [#allocation5], 64, 64, 4
        $region16: #{tpu_custom_call.1} parent=11 // pred_fallthru
          _
        // Predicated region
        $region17: #{tpu_custom_call.1} parent=11 // pred_check
          %p179 = pneg %p83
        $region18: #{tpu_custom_call.1} parent=11 // pred_check_branch
          %181 = sbr.rel (%p179) target = $region20
        $region19: #{tpu_custom_call.1} parent=11 // pred_region
          _
        $region20: #{tpu_custom_call.1} parent=11 // pred_fallthru
          _
        // Predicated region
        $region21: #{tpu_custom_call.1} parent=11 // pred_check
          %p182 = pneg %p104
        $region22: #{tpu_custom_call.1} parent=11 // pred_check_branch
          %184 = sbr.rel (%p182) target = $region24
        $region23: #{tpu_custom_call.1} parent=11 // pred_region
          %s186 = ssub.s32 1024, 1024
          %187 = vsyncadd [#allocation5], %s186
          %s188 = sshll.u32 [#allocation6], 4
          %s189 = int_to_ptr.vmem [resolvable:$true] %s188
          %194 = dma.hbm_to_vmem [thread:$0]  %s3, 1024, %s189, [#allocation5], 64, 64, 4
        $region24: #{tpu_custom_call.1} parent=11 // pred_fallthru
          _
        // Predicated region
        $region25: #{tpu_custom_call.1} parent=11 // pred_check
          %p195 = pneg %p125
        $region26: #{tpu_custom_call.1} parent=11 // pred_check_branch
          %197 = sbr.rel (%p195) target = $region28
        $region27: #{tpu_custom_call.1} parent=11 // pred_region
          _
        $region28: #{tpu_custom_call.1} parent=11 // pred_fallthru
          _
      $region12: #{tpu_custom_call.1} parent=5 // pred_fallthru
        _
      %p198 = scmp.lt.s32.totalorder %s15, 2
      // Predicated region
      $region29: #{tpu_custom_call.1} parent=5 // pred_check
        %p199 = pneg %p198
      $region30: #{tpu_custom_call.1} parent=5 // pred_check_branch
        %201 = sbr.rel (%p199) target = $region32
      $region31: #{tpu_custom_call.1} parent=5 // pred_region
        // Predicated region
        $region33: #{tpu_custom_call.1} parent=31 // pred_check
          %p202 = pneg %p35
        $region34: #{tpu_custom_call.1} parent=31 // pred_check_branch
          %204 = sbr.rel (%p202) target = $region36
        $region35: #{tpu_custom_call.1} parent=31 // pred_region
          %s205 = sand.u32 %s25, 1
          %s206 = scalar_lea.sflag [#allocation3], %s205
          %s207 = sand.u32 %s25, 1
          %s208 = smul.addr %s207, 4
          %s209 = scalar_lea.vmem [#allocation2], %s208
          %s211 = ssub.s32 64, 64
          %212 = vsyncadd %s206, %s211
          %s213 = smul.addr %s15, 64
          %s214 = scalar_lea.hbm %s0, %s213
          %s216 = sshll.u32 %s209, 4
          %s217 = int_to_ptr.vmem [resolvable:$true] %s216
          %219 = dma.hbm_to_vmem [thread:$0]  %s214, 64, %s217, %s206
        $region36: #{tpu_custom_call.1} parent=31 // pred_fallthru
          _
      $region32: #{tpu_custom_call.1} parent=5 // pred_fallthru
        _
      %p220 = scmp.le.s32.totalorder 1, %s15
      %p221 = scmp.lt.s32.totalorder %s15, 3
      %p222 = pnand %p220, %p221
      %p223 = pneg %p222
      // Predicated region
      $region37: #{tpu_custom_call.1} parent=5 // pred_check
        _
      $region38: #{tpu_custom_call.1} parent=5 // pred_check_branch
        %225 = sbr.rel (%p222) target = $region40
      $region39: #{tpu_custom_call.1} parent=5 // pred_region
        %s226 = ssub.s32 %s15, 1
        %s227 = sand.u32 %s28, 1
        %s228 = scalar_lea.sflag [#allocation3], %s227
        %s229 = sand.u32 %s28, 1
        %s230 = smul.addr %s229, 4
        %s231 = scalar_lea.vmem [#allocation2], %s230
        // Predicated region
        $region41: #{tpu_custom_call.1} parent=39 // pred_check
          %p232 = pneg %p41
        $region42: #{tpu_custom_call.1} parent=39 // pred_check_branch
          %234 = sbr.rel (%p232) target = $region44
        $region43: #{tpu_custom_call.1} parent=39 // pred_region
          %235 = dma.done %s228, 64
        $region44: #{tpu_custom_call.1} parent=39 // pred_fallthru
          _
        // Predicated region
        $region45: #{tpu_custom_call.1} parent=39 // pred_check
          %p236 = pneg %p62
        $region46: #{tpu_custom_call.1} parent=39 // pred_check_branch
          %238 = sbr.rel (%p236) target = $region48
        $region47: #{tpu_custom_call.1} parent=39 // pred_region
          %239 = dma.done [#allocation5], 256
        $region48: #{tpu_custom_call.1} parent=39 // pred_fallthru
          _
        // Predicated region
        $region49: #{tpu_custom_call.1} parent=39 // pred_check
          %p240 = pneg %p104
        $region50: #{tpu_custom_call.1} parent=39 // pred_check_branch
          %242 = sbr.rel (%p240) target = $region52
        $region51: #{tpu_custom_call.1} parent=39 // pred_region
          %243 = dma.done [#allocation5], 1024
        $region52: #{tpu_custom_call.1} parent=39 // pred_fallthru
          _
        %s244 = sand.u32 %s28, 1
        %s245 = scalar_lea.sflag [#allocation3], %s244
        %s246 = sand.u32 %s28, 1
        %s247 = smul.addr %s246, 4
        %s248 = scalar_lea.vmem [#allocation2], %s247
        %p249 = pneg %p41
        %p250 = pneg %p38
        %p251 = pneg %p62
        %p252 = pneg %p59
        %p253 = pneg %p83
        %p254 = pneg %p80
        %p255 = pneg %p104
        %p256 = pneg %p101
        %p257 = pneg %p125
        %p258 = pneg %p122
        %p259 = pneg %p151
        %p260 = pneg %p148
        %p261 = scmp.lt.s32.totalorder %s20, 1
        %s262 = scalar_select %p261, %s20, 1
        %s263 = smul.addr %s262, 8
        %s264 = scalar_lea.vmem %s5, %s263
        %p265 = scmp.lt.s32.totalorder %s20, 1
        %s266 = scalar_select %p265, %s20, 1
        %s267 = smul.addr %s266, 8
        %s268 = scalar_lea.vmem %s5, %s267
        %v270 = vld [vmem:[%s231] sm:$0xf]
        %v271 = vld [vmem:[#allocation4] sm:$0xf]
        %v272 = vld [vmem:[#allocation4 + $0x4] sm:$0xf]
        %v273 = vld [vmem:[#allocation4 + $0x8] sm:$0xf]
        %v274 = vld [vmem:[#allocation4 + $0xc] sm:$0xf]
        %v275 = vld [vmem:[%s2] sm:$0x1]
        %v277 = vlaneseq
        %v278 = vshrl.u32 %v277, 7
        %v279 = vsub.s32 0, %v278
        %v280 = vrot.slane %v275, %v279
        %v286 = vunpack.c.l.b16 %v271
        %v287 = vunpack.c.l.b16 %v272
        %v288 = vunpack.c.l.b16 %v273
        %v289 = vunpack.c.l.b16 %v274
        %v290 = vpack.c.b16 %v287, %v286
        %v291 = vpack.c.b16 %v289, %v288
        %vm294 = vcmask 261120
        %v296 = vsel %vm294, %v270, 0
        %298 = vmatprep.subr.bf16.mxu0 0
        %299 = vmatpush1.bf16.msra.mxu0 0
        %300 = vmatprep.subr.bf16.mxu0 0
        %301 = vmatpush1.bf16.msra.mxu0 0
        %302 = vmatprep.subr.bf16.mxu0 0
        %303 = vmatpush1.bf16.msra.mxu0 0
        %304 = vmatprep.subr.bf16.mxu0 0
        %305 = vmatpush1.bf16.msra.mxu0 0
        %306 = vmatprep.subr.bf16.mxu0 0
        %307 = vmatpush1.bf16.msra.mxu0 0
        %308 = vmatprep.subr.bf16.mxu0 0
        %309 = vmatpush1.bf16.msra.mxu0 0
        %310 = vmatprep.subr.bf16.mxu0 0
        %311 = vmatpush1.bf16.msra.mxu0 %v291
        %312 = vmatprep.subr.bf16.mxu0 0
        %313 = vmatpush1.bf16.msra.mxu0 %v290
        %314 = vmatprep.subr.bf16.mxu0 0
        %315 = vmatpush2.bf16.msra.mxu0 0
        %316 = vmatprep.subr.bf16.mxu0 0
        %317 = vmatpush2.bf16.msra.mxu0 0
        %318 = vmatprep.subr.bf16.mxu0 0
        %319 = vmatpush2.bf16.msra.mxu0 0
        %320 = vmatprep.subr.bf16.mxu0 0
        %321 = vmatpush2.bf16.msra.mxu0 0
        %322 = vmatprep.subr.bf16.mxu0 0
        %323 = vmatpush2.bf16.msra.mxu0 0
        %324 = vmatprep.subr.bf16.mxu0 0
        %325 = vmatpush2.bf16.msra.mxu0 0
        %326 = vmatprep.subr.bf16.mxu0 0
        %327 = vmatpush2.bf16.msra.mxu0 0
        %328 = vmatprep.subr.bf16.mxu0 0
        %329 = vmatpush2.bf16.msra.mxu0 0
        %330 = vmatprep.mubr.bf16.mxu0 0
        %331 = vmatmul.mubr.bf16.gmra.mxu0 %v296
        %v332 = vpop.f32.mrf.mxu0
        %v333 = vadd.f32 %v280, %v332
        %v334 = vpop.f32.mrf.mxu0
        %v335 = vpop.f32.mrf.mxu0
        %v336 = vpop.f32.mrf.mxu0
        %337 = vdwg.mxu0
        %v338 = vtanh.pop %v333
        %v339 = vpack.c.bf16 %v338, %v338
        %v340 = vld [vmem:[#allocation6] sm:$0xf]
        %v341 = vld [vmem:[#allocation6 + $0x4] sm:$0xf]
        %v342 = vld [vmem:[#allocation6 + $0x8] sm:$0xf]
        %v343 = vld [vmem:[#allocation6 + $0xc] sm:$0xf]
        %v344 = vld [vmem:[#allocation6 + $0x10] sm:$0xf]
        %v345 = vld [vmem:[#allocation6 + $0x14] sm:$0xf]
        %v346 = vld [vmem:[#allocation6 + $0x18] sm:$0xf]
        %v347 = vld [vmem:[#allocation6 + $0x1c] sm:$0xf]
        %v348 = vld [vmem:[#allocation6 + $0x20] sm:$0xf]
        %v349 = vld [vmem:[#allocation6 + $0x24] sm:$0xf]
        %v350 = vld [vmem:[#allocation6 + $0x28] sm:$0xf]
        %v351 = vld [vmem:[#allocation6 + $0x2c] sm:$0xf]
        %v352 = vld [vmem:[#allocation6 + $0x30] sm:$0xf]
        %v353 = vld [vmem:[#allocation6 + $0x34] sm:$0xf]
        %v354 = vld [vmem:[#allocation6 + $0x38] sm:$0xf]
        %v355 = vld [vmem:[#allocation6 + $0x3c] sm:$0xf]
        %v356 = vld [vmem:[%s4] sm:$0x1]
        %v358 = vlaneseq
        %v359 = vshrl.u32 %v358, 7
        %v360 = vsub.s32 0, %v359
        %v361 = vrot.slane %v356, %v360
        %v379 = vunpack.c.l.b16 %v340
        %v380 = vunpack.c.l.b16 %v341
        %v381 = vunpack.c.l.b16 %v342
        %v382 = vunpack.c.l.b16 %v343
        %v383 = vunpack.c.l.b16 %v344
        %v384 = vunpack.c.l.b16 %v345
        %v385 = vunpack.c.l.b16 %v346
        %v386 = vunpack.c.l.b16 %v347
        %v387 = vunpack.c.l.b16 %v348
        %v388 = vunpack.c.l.b16 %v349
        %v389 = vunpack.c.l.b16 %v350
        %v390 = vunpack.c.l.b16 %v351
        %v391 = vunpack.c.l.b16 %v352
        %v392 = vunpack.c.l.b16 %v353
        %v393 = vunpack.c.l.b16 %v354
        %v394 = vunpack.c.l.b16 %v355
        %v395 = vpack.c.b16 %v380, %v379
        %v396 = vpack.c.b16 %v382, %v381
        %v397 = vpack.c.b16 %v384, %v383
        %v398 = vpack.c.b16 %v386, %v385
        %v399 = vpack.c.b16 %v388, %v387
        %v400 = vpack.c.b16 %v390, %v389
        %v401 = vpack.c.b16 %v392, %v391
        %v402 = vpack.c.b16 %v394, %v393
        %411 = vmatprep.subr.bf16.mxu0 0
        %412 = vmatpush1.bf16.msra.mxu0 %v402
        %413 = vmatprep.subr.bf16.mxu0 0
        %414 = vmatpush1.bf16.msra.mxu0 %v401
        %415 = vmatprep.subr.bf16.mxu0 0
        %416 = vmatpush1.bf16.msra.mxu0 %v400
        %417 = vmatprep.subr.bf16.mxu0 0
        %418 = vmatpush1.bf16.msra.mxu0 %v399
        %419 = vmatprep.subr.bf16.mxu0 0
        %420 = vmatpush1.bf16.msra.mxu0 %v398
        %421 = vmatprep.subr.bf16.mxu0 0
        %422 = vmatpush1.bf16.msra.mxu0 %v397
        %423 = vmatprep.subr.bf16.mxu0 0
        %424 = vmatpush1.bf16.msra.mxu0 %v396
        %425 = vmatprep.subr.bf16.mxu0 0
        %426 = vmatpush1.bf16.msra.mxu0 %v395
        %427 = vmatprep.subr.bf16.mxu0 0
        %428 = vmatpush2.bf16.msra.mxu0 0
        %429 = vmatprep.subr.bf16.mxu0 0
        %430 = vmatpush2.bf16.msra.mxu0 0
        %431 = vmatprep.subr.bf16.mxu0 0
        %432 = vmatpush2.bf16.msra.mxu0 0
        %433 = vmatprep.subr.bf16.mxu0 0
        %434 = vmatpush2.bf16.msra.mxu0 0
        %435 = vmatprep.subr.bf16.mxu0 0
        %436 = vmatpush2.bf16.msra.mxu0 0
        %437 = vmatprep.subr.bf16.mxu0 0
        %438 = vmatpush2.bf16.msra.mxu0 0
        %439 = vmatprep.subr.bf16.mxu0 0
        %440 = vmatpush2.bf16.msra.mxu0 0
        %441 = vmatprep.subr.bf16.mxu0 0
        %442 = vmatpush2.bf16.msra.mxu0 0
        %443 = vmatprep.mubr.bf16.mxu0 0
        %444 = vmatmul.mubr.bf16.gmra.mxu0 %v339
        %v445 = vpop.f32.mrf.mxu0
        %v446 = vadd.f32 %v361, %v445
        %v447 = vpop.f32.mrf.mxu0
        %v448 = vpop.f32.mrf.mxu0
        %v449 = vpop.f32.mrf.mxu0
        %450 = vdwg.mxu0
        %v451 = vrot.slane %v446, 4
        %v452 = vmax.f32 %v446, %v451
        %v453 = vrot.slane %v452, 2
        %v454 = vmax.f32 %v452, %v453
        %v455 = vrot.slane %v454, 1
        %v456 = vmax.f32 %v454, %v455
        %v457 = vsub.f32 %v446, %v456
        %v458 = vmul.f32 %v457, 1.442695
        %v459 = vpow.pop %v458
        %v460 = vrot.slane %v459, 4
        %v461 = vadd.f32 %v459, %v460
        %v462 = vrot.slane %v461, 2
        %v463 = vadd.f32 %v461, %v462
        %v464 = vrot.slane %v463, 1
        %v465 = vadd.f32 %v463, %v464
        %v466 = vrcp.pop %v465
        %v467 = vmul.f32 %v459, %v466
        %vm468 = vcmask 31744
        %469 = vst.msk [vmem:[%s268] sm:$0xff] %vm468, %v467
        %p470 = scmp.lt.s32.totalorder %s20, 1
        %s471 = scalar_select %p470, %s20, 1
        %s472 = smul.addr %s471, 8
        %s473 = scalar_lea.vmem %s5, %s472
        // Predicated region
        $region53: #{tpu_custom_call.1} parent=39 // pred_check
          %p474 = pneg %p148
        $region54: #{tpu_custom_call.1} parent=39 // pred_check_branch
          %476 = sbr.rel (%p474) target = $region56
        $region55: #{tpu_custom_call.1} parent=39 // pred_region
          _
        $region56: #{tpu_custom_call.1} parent=39 // pred_fallthru
          _
      $region40: #{tpu_custom_call.1} parent=5 // pred_fallthru
        _
      %p477 = scmp.le.s32.totalorder 2, %s15
      // Predicated region
      $region57: #{tpu_custom_call.1} parent=5 // pred_check
        %p478 = pneg %p477
      $region58: #{tpu_custom_call.1} parent=5 // pred_check_branch
        %480 = sbr.rel (%p478) target = $region60
      $region59: #{tpu_custom_call.1} parent=5 // pred_region
        %s481 = ssub.s32 %s15, 2
        // Predicated region
        $region61: #{tpu_custom_call.1} parent=59 // pred_check
          %p482 = pneg %p154
        $region62: #{tpu_custom_call.1} parent=59 // pred_check_branch
          %484 = sbr.rel (%p482) target = $region64
        $region63: #{tpu_custom_call.1} parent=59 // pred_region
          %p485 = scmp.lt.s32.totalorder %s21, 1
          %s486 = scalar_select %p485, %s21, 1
          %s487 = smul.addr %s486, 8
          %s488 = scalar_lea.vmem %s5, %s487
        $region64: #{tpu_custom_call.1} parent=59 // pred_fallthru
          _
      $region60: #{tpu_custom_call.1} parent=5 // pred_fallthru
        _
    $region6: #{tpu_custom_call.1} parent=1 // loop_footer
      %s19 = sadd.s32 1, %s15
    $region7: #{tpu_custom_call.1} parent=1 // loop_footer_branch
      %14 = sbr.rel target = $region3
    $region8: #{tpu_custom_call.1} parent=1 // loop_exit
      _
    %489 = vsyncpa [#allocation3], 1
    %s490 = scalar_lea.sflag [#allocation3], 1
    %491 = vsyncpa %s490, 1
    %492 = vsyncpa [#allocation5], 1

</llo_original>
